<compile_context>
chip_gen: v5e
topology: v5e:2x2
jax: 0.10.0
libtpu: 0.0.40
codegen_flags: <defaults>
</compile_context>

<pallas_src>
import functools

import jax
import jax.numpy as jnp
from jax.experimental import pallas as pl
from jax.experimental.pallas import tpu as pltpu

N_INPUTS = 8   # must be a power of 2 (log2 levels of the parity network)
BATCH = 2

PAD_B = 8      # sublane tile
PAD_F = 128    # lane tile


# ----------------------------- Pallas kernel -------------------------------
def _fused_parity_kernel(x_ref, w_ref, b_ref, o_ref, *, n_layers):
    """All layers fused: x -> sigmoid(x @ W_l + b_l) for l in 0..n_layers-1.

    x_ref: (PAD_B, PAD_F) f32            padded activations (one vreg)
    w_ref: (n_layers, PAD_F, PAD_F) f32  pre-transposed, zero-padded weights
    b_ref: (n_layers, 1, PAD_F) f32      zero-padded biases
    o_ref: (PAD_B, PAD_F) f32            padded output
    """
    x = x_ref[...]                                    # (8, 128), stays in vregs
    for l in range(n_layers):                         # static unroll
        y = jnp.dot(x, w_ref[l], preferred_element_type=jnp.float32)
        x = jax.nn.sigmoid(y + b_ref[l])              # bias (1,128) broadcasts
    o_ref[...] = x


# --------------------------- parameter creation -----------------------------
def make_params(key, n_inputs=N_INPUTS):
    """Deterministic synthetic weights matching NNParity.__init__ shapes.

    init_weights() applies xavier_uniform_ then normal_(mean=1) to Linear
    weights, so effectively weight ~ N(1, 1).  Bias keeps PyTorch's default
    uniform(-1/sqrt(in), 1/sqrt(in)) init.  Returned in PyTorch layout
    (out_f, in_f) for the pure-JAX reference.
    """
    layers = []
    n_levels = int(jnp.log2(jnp.array(float(n_inputs))).item())
    for i in range(n_levels):
        d_in = n_inputs // (2 ** i)
        d_mid = d_in
        d_out = n_inputs // (2 ** (i + 1))
        for (o, f) in ((d_mid, d_in), (d_out, d_mid)):
            key, kw, kb = jax.random.split(key, 3)
            w = 1.0 + jax.random.normal(kw, (o, f), dtype=jnp.float32)
            bound = 1.0 / jnp.sqrt(float(f))
            b = jax.random.uniform(kb, (o,), dtype=jnp.float32,
                                   minval=-bound, maxval=bound)
            layers.append((w, b))
    return layers


def pack_params(layers):
    """One-time layout glue: transpose, zero-pad to (PAD_F, PAD_F), stack.

    Zero padding of unused rows/cols/bias lanes ensures sigmoid(0)=0.5 junk
    in padded lanes is multiplied by zero weights in the next layer, so it
    never contaminates the real lanes.
    """
    n = len(layers)
    w_stack = jnp.zeros((n, PAD_F, PAD_F), jnp.float32)
    b_stack = jnp.zeros((n, 1, PAD_F), jnp.float32)
    for l, (w, b) in enumerate(layers):
        out_f, in_f = w.shape
        w_stack = w_stack.at[l, :in_f, :out_f].set(jnp.asarray(w, jnp.float32).T)
        b_stack = b_stack.at[l, 0, :out_f].set(jnp.asarray(b, jnp.float32))
    return w_stack, b_stack


# ------------------------------- forward ------------------------------------
@functools.partial(jax.jit, static_argnames=("n_layers", "out_f"))
def nn_parity_forward(x, w_stack, b_stack, *, n_layers, out_f):
    """Pallas-backed fused forward.  x: (B, N_INPUTS) -> (B, out_f)."""
    B, in_f = x.shape
    x_pad = (jnp.zeros((PAD_B, PAD_F), jnp.float32)
             .at[:B, :in_f].set(x.astype(jnp.float32)))

    kernel = functools.partial(_fused_parity_kernel, n_layers=n_layers)
    y_pad = pl.pallas_call(
        kernel,
        out_shape=jax.ShapeDtypeStruct((PAD_B, PAD_F), jnp.float32),
        # Tiny working set (< 0.5 MiB total): single full-array VMEM blocks,
        # no grid, no pipelining needed on any TPU generation.
        in_specs=[
            pl.BlockSpec(memory_space=pltpu.MemorySpace.VMEM),
            pl.BlockSpec(memory_space=pltpu.MemorySpace.VMEM),
            pl.BlockSpec(memory_space=pltpu.MemorySpace.VMEM),
        ],
        out_specs=pl.BlockSpec(memory_space=pltpu.MemorySpace.VMEM),
    )(x_pad, w_stack, b_stack)

    return y_pad[:B, :out_f]


def nn_parity_forward_ref(x, layers):
    """Pure-JAX reference for validation (PyTorch Linear semantics)."""
    x = jnp.asarray(x, jnp.float32)
    for (w, b) in layers:
        x = jax.nn.sigmoid(x @ w.T + b)
    return x


# --------------------------------- main --------------------------------------
if __name__ == "__main__":
    key = jax.random.PRNGKey(0)
    key, kx = jax.random.split(key)

    # Parity-style input: batch of binary vectors of length N_INPUTS.
    x = jax.random.bernoulli(kx, 0.5, (BATCH, N_INPUTS)).astype(jnp.float32)

    layers = make_params(key, N_INPUTS)
    w_stack, b_stack = pack_params(layers)
    n_layers = len(layers)
    out_f = layers[-1][0].shape[0]   # final Linear out_features (== 1)

    out = nn_parity_forward(x, w_stack, b_stack, n_layers=n_layers, out_f=out_f)
    out = jax.block_until_ready(out)

    ref = nn_parity_forward_ref(x, layers)
    assert out.shape == (BATCH, out_f), out.shape
    assert jnp.allclose(out, ref, atol=1e-5, rtol=1e-5), (out, ref)

    print("KERNEL_OK")
</pallas_src>

<mosaic_0001>
module attributes {stable_mosaic.version = 11 : i64} {
  func.func @_fused_parity_kernel(%arg0: memref<8x128xf32, #tpu.memory_space<vmem>>, %arg1: memref<6x128x128xf32, #tpu.memory_space<vmem>>, %arg2: memref<6x1x128xf32, #tpu.memory_space<vmem>>, %arg3: memref<8x128xf32, #tpu.memory_space<vmem>>) attributes {dimension_semantics = [], scalar_prefetch = 0 : i64, scratch_operands = 0 : i64, tpu.core_type = #tpu.core_type<tc>} {
    %c0 = arith.constant 0 : index
    %c0_0 = arith.constant 0 : index
    %0 = vector.load %arg0[%c0, %c0_0] : memref<8x128xf32, #tpu.memory_space<vmem>>, vector<8x128xf32>
    %c0_1 = arith.constant 0 : index
    %c0_2 = arith.constant 0 : index
    %c0_3 = arith.constant 0 : index
    %1 = vector.load %arg1[%c0_1, %c0_2, %c0_3] : memref<6x128x128xf32, #tpu.memory_space<vmem>>, vector<1x128x128xf32>
    %2 = vector.shape_cast %1 : vector<1x128x128xf32> to vector<128x128xf32>
    %cst = arith.constant dense<0.000000e+00> : vector<8x128xf32>
    %3 = tpu.matmul %0, %2, %cst {dimension_numbers = #tpu.dot_dimension_numbers<[1], [0], [0], [1], [0, 0, 1, 1], [], []>} : vector<8x128xf32>, vector<128x128xf32>, vector<8x128xf32> -> vector<8x128xf32>
    %c0_4 = arith.constant 0 : index
    %c0_5 = arith.constant 0 : index
    %c0_6 = arith.constant 0 : index
    %4 = vector.load %arg2[%c0_4, %c0_5, %c0_6] : memref<6x1x128xf32, #tpu.memory_space<vmem>>, vector<1x1x128xf32>
    %5 = vector.shape_cast %4 : vector<1x1x128xf32> to vector<1x128xf32>
    %6 = vector.broadcast %5 : vector<1x128xf32> to vector<8x128xf32>
    %7 = arith.addf %3, %6 : vector<8x128xf32>
    %8 = arith.negf %7 : vector<8x128xf32>
    %9 = math.exp %8 : vector<8x128xf32>
    %cst_7 = arith.constant 1.000000e+00 : f32
    %10 = vector.broadcast %cst_7 : f32 to vector<8x128xf32>
    %11 = arith.addf %10, %9 : vector<8x128xf32>
    %12 = arith.divf %10, %11 : vector<8x128xf32>
    %c1 = arith.constant 1 : index
    %c0_8 = arith.constant 0 : index
    %c0_9 = arith.constant 0 : index
    %13 = vector.load %arg1[%c1, %c0_8, %c0_9] : memref<6x128x128xf32, #tpu.memory_space<vmem>>, vector<1x128x128xf32>
    %14 = vector.shape_cast %13 : vector<1x128x128xf32> to vector<128x128xf32>
    %cst_10 = arith.constant dense<0.000000e+00> : vector<8x128xf32>
    %15 = tpu.matmul %12, %14, %cst_10 {dimension_numbers = #tpu.dot_dimension_numbers<[1], [0], [0], [1], [0, 0, 1, 1], [], []>} : vector<8x128xf32>, vector<128x128xf32>, vector<8x128xf32> -> vector<8x128xf32>
    %c1_11 = arith.constant 1 : index
    %c0_12 = arith.constant 0 : index
    %c0_13 = arith.constant 0 : index
    %16 = vector.load %arg2[%c1_11, %c0_12, %c0_13] : memref<6x1x128xf32, #tpu.memory_space<vmem>>, vector<1x1x128xf32>
    %17 = vector.shape_cast %16 : vector<1x1x128xf32> to vector<1x128xf32>
    %18 = vector.broadcast %17 : vector<1x128xf32> to vector<8x128xf32>
    %19 = arith.addf %15, %18 : vector<8x128xf32>
    %20 = arith.negf %19 : vector<8x128xf32>
    %21 = math.exp %20 : vector<8x128xf32>
    %cst_14 = arith.constant 1.000000e+00 : f32
    %22 = vector.broadcast %cst_14 : f32 to vector<8x128xf32>
    %23 = arith.addf %22, %21 : vector<8x128xf32>
    %24 = arith.divf %22, %23 : vector<8x128xf32>
    %c2 = arith.constant 2 : index
    %c0_15 = arith.constant 0 : index
    %c0_16 = arith.constant 0 : index
    %25 = vector.load %arg1[%c2, %c0_15, %c0_16] : memref<6x128x128xf32, #tpu.memory_space<vmem>>, vector<1x128x128xf32>
    %26 = vector.shape_cast %25 : vector<1x128x128xf32> to vector<128x128xf32>
    %cst_17 = arith.constant dense<0.000000e+00> : vector<8x128xf32>
    %27 = tpu.matmul %24, %26, %cst_17 {dimension_numbers = #tpu.dot_dimension_numbers<[1], [0], [0], [1], [0, 0, 1, 1], [], []>} : vector<8x128xf32>, vector<128x128xf32>, vector<8x128xf32> -> vector<8x128xf32>
    %c2_18 = arith.constant 2 : index
    %c0_19 = arith.constant 0 : index
    %c0_20 = arith.constant 0 : index
    %28 = vector.load %arg2[%c2_18, %c0_19, %c0_20] : memref<6x1x128xf32, #tpu.memory_space<vmem>>, vector<1x1x128xf32>
    %29 = vector.shape_cast %28 : vector<1x1x128xf32> to vector<1x128xf32>
    %30 = vector.broadcast %29 : vector<1x128xf32> to vector<8x128xf32>
    %31 = arith.addf %27, %30 : vector<8x128xf32>
    %32 = arith.negf %31 : vector<8x128xf32>
    %33 = math.exp %32 : vector<8x128xf32>
    %cst_21 = arith.constant 1.000000e+00 : f32
    %34 = vector.broadcast %cst_21 : f32 to vector<8x128xf32>
    %35 = arith.addf %34, %33 : vector<8x128xf32>
    %36 = arith.divf %34, %35 : vector<8x128xf32>
    %c3 = arith.constant 3 : index
    %c0_22 = arith.constant 0 : index
    %c0_23 = arith.constant 0 : index
    %37 = vector.load %arg1[%c3, %c0_22, %c0_23] : memref<6x128x128xf32, #tpu.memory_space<vmem>>, vector<1x128x128xf32>
    %38 = vector.shape_cast %37 : vector<1x128x128xf32> to vector<128x128xf32>
    %cst_24 = arith.constant dense<0.000000e+00> : vector<8x128xf32>
    %39 = tpu.matmul %36, %38, %cst_24 {dimension_numbers = #tpu.dot_dimension_numbers<[1], [0], [0], [1], [0, 0, 1, 1], [], []>} : vector<8x128xf32>, vector<128x128xf32>, vector<8x128xf32> -> vector<8x128xf32>
    %c3_25 = arith.constant 3 : index
    %c0_26 = arith.constant 0 : index
    %c0_27 = arith.constant 0 : index
    %40 = vector.load %arg2[%c3_25, %c0_26, %c0_27] : memref<6x1x128xf32, #tpu.memory_space<vmem>>, vector<1x1x128xf32>
    %41 = vector.shape_cast %40 : vector<1x1x128xf32> to vector<1x128xf32>
    %42 = vector.broadcast %41 : vector<1x128xf32> to vector<8x128xf32>
    %43 = arith.addf %39, %42 : vector<8x128xf32>
    %44 = arith.negf %43 : vector<8x128xf32>
    %45 = math.exp %44 : vector<8x128xf32>
    %cst_28 = arith.constant 1.000000e+00 : f32
    %46 = vector.broadcast %cst_28 : f32 to vector<8x128xf32>
    %47 = arith.addf %46, %45 : vector<8x128xf32>
    %48 = arith.divf %46, %47 : vector<8x128xf32>
    %c4 = arith.constant 4 : index
    %c0_29 = arith.constant 0 : index
    %c0_30 = arith.constant 0 : index
    %49 = vector.load %arg1[%c4, %c0_29, %c0_30] : memref<6x128x128xf32, #tpu.memory_space<vmem>>, vector<1x128x128xf32>
    %50 = vector.shape_cast %49 : vector<1x128x128xf32> to vector<128x128xf32>
    %cst_31 = arith.constant dense<0.000000e+00> : vector<8x128xf32>
    %51 = tpu.matmul %48, %50, %cst_31 {dimension_numbers = #tpu.dot_dimension_numbers<[1], [0], [0], [1], [0, 0, 1, 1], [], []>} : vector<8x128xf32>, vector<128x128xf32>, vector<8x128xf32> -> vector<8x128xf32>
    %c4_32 = arith.constant 4 : index
    %c0_33 = arith.constant 0 : index
    %c0_34 = arith.constant 0 : index
    %52 = vector.load %arg2[%c4_32, %c0_33, %c0_34] : memref<6x1x128xf32, #tpu.memory_space<vmem>>, vector<1x1x128xf32>
    %53 = vector.shape_cast %52 : vector<1x1x128xf32> to vector<1x128xf32>
    %54 = vector.broadcast %53 : vector<1x128xf32> to vector<8x128xf32>
    %55 = arith.addf %51, %54 : vector<8x128xf32>
    %56 = arith.negf %55 : vector<8x128xf32>
    %57 = math.exp %56 : vector<8x128xf32>
    %cst_35 = arith.constant 1.000000e+00 : f32
    %58 = vector.broadcast %cst_35 : f32 to vector<8x128xf32>
    %59 = arith.addf %58, %57 : vector<8x128xf32>
    %60 = arith.divf %58, %59 : vector<8x128xf32>
    %c5 = arith.constant 5 : index
    %c0_36 = arith.constant 0 : index
    %c0_37 = arith.constant 0 : index
    %61 = vector.load %arg1[%c5, %c0_36, %c0_37] : memref<6x128x128xf32, #tpu.memory_space<vmem>>, vector<1x128x128xf32>
    %62 = vector.shape_cast %61 : vector<1x128x128xf32> to vector<128x128xf32>
    %cst_38 = arith.constant dense<0.000000e+00> : vector<8x128xf32>
    %63 = tpu.matmul %60, %62, %cst_38 {dimension_numbers = #tpu.dot_dimension_numbers<[1], [0], [0], [1], [0, 0, 1, 1], [], []>} : vector<8x128xf32>, vector<128x128xf32>, vector<8x128xf32> -> vector<8x128xf32>
    %c5_39 = arith.constant 5 : index
    %c0_40 = arith.constant 0 : index
    %c0_41 = arith.constant 0 : index
    %64 = vector.load %arg2[%c5_39, %c0_40, %c0_41] : memref<6x1x128xf32, #tpu.memory_space<vmem>>, vector<1x1x128xf32>
    %65 = vector.shape_cast %64 : vector<1x1x128xf32> to vector<1x128xf32>
    %66 = vector.broadcast %65 : vector<1x128xf32> to vector<8x128xf32>
    %67 = arith.addf %63, %66 : vector<8x128xf32>
    %68 = arith.negf %67 : vector<8x128xf32>
    %69 = math.exp %68 : vector<8x128xf32>
    %cst_42 = arith.constant 1.000000e+00 : f32
    %70 = vector.broadcast %cst_42 : f32 to vector<8x128xf32>
    %71 = arith.addf %70, %69 : vector<8x128xf32>
    %72 = arith.divf %70, %71 : vector<8x128xf32>
    %c0_43 = arith.constant 0 : index
    %c0_44 = arith.constant 0 : index
    %73 = vector.load %arg3[%c0_43, %c0_44] : memref<8x128xf32, #tpu.memory_space<vmem>>, vector<8x128xf32>
    tpu.vector_store %arg3[%c0_43, %c0_44], %72 {strides = array<i32>} : memref<8x128xf32, #tpu.memory_space<vmem>>, vector<8x128xf32>,
    return
  }
}

</mosaic_0001>

<llo_original>
// kernel: nn_parity_forward.1
$region0: #{nn_parity_forward.1}
  #allocation0 [shape = 'u32[]', space=smem, size = 0x4, offset = 0x4, fixed_abs, tag = 'smem constant byte address 0x4 - core index']
  #allocation1 [shape = 'u32[72,128]{1,0:T(1,128)}', space=vmem, size = 0x9000, scoped, tag = 'internal scratch']
  %s0 = inlined_call_operand.vmem [shape: f32[8,128], index: 0, kind: input, shape index: {}]
  %s1 = inlined_call_operand.hbm [shape: f32[6,128,128], index: 1, kind: input, shape index: {}]
  %s2 = inlined_call_operand.vmem [shape: f32[6,1,128], index: 2, kind: input, shape index: {}]
  %s3 = inlined_call_operand.vmem [shape: f32[8,128], index: 3, kind: output, shape index: {}]
  %s4 = sld [smem:[#allocation0]]
  $region26: #{nn_parity_forward.1} parent=0
    _
  %s6 = ssub.s32 1, %s4
  %s7 = scalar_select 0, %s6, %s4
  $region1: #{nn_parity_forward.1} parent=0
    #allocation2 [shape = 'u8[393216]{0}', space=vmem, size = 0x60000, scoped, tag = 'input window, operand 1, single buffered']
    #allocation3 [shape = 's32[1]{0}', space=sflag, size = 0x4, scoped, tag = 'scoped memory for nn_parity_forward.1']
    %8 = vsyncpa [#allocation3], 0
    // Predicated region
    $region2: #{nn_parity_forward.1} parent=1 // pred_check
      _
    $region3: #{nn_parity_forward.1} parent=1 // pred_check_branch
      %10 = sbr.rel (0) target = $region5
    $region4: #{nn_parity_forward.1} parent=1 // pred_region
      _
    $region5: #{nn_parity_forward.1} parent=1 // pred_fallthru
      _
    // Predicated region
    $region6: #{nn_parity_forward.1} parent=1 // pred_check
      _
    $region7: #{nn_parity_forward.1} parent=1 // pred_check_branch
      %12 = sbr.rel (0) target = $region9
    $region8: #{nn_parity_forward.1} parent=1 // pred_region
      %14 = vsyncadd [#allocation3], 0
      %s15 = sshll.u32 %s1, 4
      %s16 = int_to_ptr.hbm [resolvable:$true] %s15
      %s17 = sshll.u32 [#allocation2], 4
      %s18 = int_to_ptr.vmem [resolvable:$true] %s17
      %23 = dma.hbm_to_vmem [thread:$0]  %s16, 12288, %s18, [#allocation3], 128, 128, 8
    $region9: #{nn_parity_forward.1} parent=1 // pred_fallthru
      _
    // Predicated region
    $region10: #{nn_parity_forward.1} parent=1 // pred_check
      _
    $region11: #{nn_parity_forward.1} parent=1 // pred_check_branch
      %25 = sbr.rel (0) target = $region13
    $region12: #{nn_parity_forward.1} parent=1 // pred_region
      _
    $region13: #{nn_parity_forward.1} parent=1 // pred_fallthru
      _
    // Predicated region
    $region14: #{nn_parity_forward.1} parent=1 // pred_check
      _
    $region15: #{nn_parity_forward.1} parent=1 // pred_check_branch
      %27 = sbr.rel (0) target = $region17
    $region16: #{nn_parity_forward.1} parent=1 // pred_region
      %29 = dma.done [#allocation3], 12288
    $region17: #{nn_parity_forward.1} parent=1 // pred_fallthru
      _
    %v30 = vld [vmem:[%s0] sm:$0xff]
    %v31 = vld [vmem:[#allocation2] sm:$0xff]
    %v32 = vld [vmem:[#allocation2 + $0x8] sm:$0xff]
    %v33 = vld [vmem:[#allocation2 + $0x10] sm:$0xff]
    %v34 = vld [vmem:[#allocation2 + $0x18] sm:$0xff]
    %v35 = vld [vmem:[#allocation2 + $0x20] sm:$0xff]
    %v36 = vld [vmem:[#allocation2 + $0x28] sm:$0xff]
    %v37 = vld [vmem:[#allocation2 + $0x30] sm:$0xff]
    %v38 = vld [vmem:[#allocation2 + $0x38] sm:$0xff]
    %v39 = vld [vmem:[#allocation2 + $0x40] sm:$0xff]
    %v40 = vld [vmem:[#allocation2 + $0x48] sm:$0xff]
    %v41 = vld [vmem:[#allocation2 + $0x50] sm:$0xff]
    %v42 = vld [vmem:[#allocation2 + $0x58] sm:$0xff]
    %v43 = vld [vmem:[#allocation2 + $0x60] sm:$0xff]
    %v44 = vld [vmem:[#allocation2 + $0x68] sm:$0xff]
    %v45 = vld [vmem:[#allocation2 + $0x70] sm:$0xff]
    %v46 = vld [vmem:[#allocation2 + $0x78] sm:$0xff]
    %v47 = vld [vmem:[%s2] sm:$0x1]
    %v49 = vperm.slane %v47, 0
    %51 = vmatpush.msra.mxu0 %v46
    %52 = vmatpush.msra.mxu0 %v45
    %53 = vmatpush.msra.mxu0 %v44
    %54 = vmatpush.msra.mxu0 %v43
    %55 = vmatpush.msra.mxu0 %v42
    %56 = vmatpush.msra.mxu0 %v41
    %57 = vmatpush.msra.mxu0 %v40
    %58 = vmatpush.msra.mxu0 %v39
    %59 = vmatpush.msra.mxu0 %v38
    %60 = vmatpush.msra.mxu0 %v37
    %61 = vmatpush.msra.mxu0 %v36
    %62 = vmatpush.msra.mxu0 %v35
    %63 = vmatpush.msra.mxu0 %v34
    %64 = vmatpush.msra.mxu0 %v33
    %65 = vmatpush.msra.mxu0 %v32
    %66 = vmatpush.msra.mxu0 %v31
    %67 = vmatmul.f32.gmra.mxu0 %v30
    %v68 = vpop.f32.mrf.mxu0
    %v69 = vadd.f32 %v49, %v68
    %70 = vdwg.mxu0
    %v71 = vxor.u32 %v69, 2147483648
    %v72 = vmul.f32 %v71, 1.442695
    %v73 = vpow.pop %v72
    %v74 = vadd.f32 %v73, 1.0
    %v75 = vrcp.pop %v74
    %v76 = vmul.f32 %v74, %v75
    %v77 = vsub.f32 1.0, %v76
    %v78 = vmul.f32 %v75, %v77
    %v79 = vadd.f32 %v75, %v78
    %vm80 = vweird.f32 %v74
    %vm81 = vweird.f32 %v75
    %vm82 = vmor %vm80, %vm81
    %v83 = vsel %vm82, %v75, %v79
    %v84 = vand.u32 2147483647, %v74
    %vm85 = vcmp.eq.f32.partialorder %v84, 8.507059e+37
    %v86 = vand.u32 %v74, 2147483648
    %v87 = vor.u32 1.1754944e-38, %v86
    %v88 = vsel %vm85, %v87, %v83
    %v89 = vmul.f32 1.0, %v88
    %s90 = scalar_lea.vmem [#allocation2], 128
    %v91 = vld [vmem:[%s90] sm:$0xff]
    %v92 = vld [vmem:[%s90 + $0x8] sm:$0xff]
    %v93 = vld [vmem:[%s90 + $0x10] sm:$0xff]
    %v94 = vld [vmem:[%s90 + $0x18] sm:$0xff]
    %v95 = vld [vmem:[%s90 + $0x20] sm:$0xff]
    %v96 = vld [vmem:[%s90 + $0x28] sm:$0xff]
    %v97 = vld [vmem:[%s90 + $0x30] sm:$0xff]
    %v98 = vld [vmem:[%s90 + $0x38] sm:$0xff]
    %v99 = vld [vmem:[%s90 + $0x40] sm:$0xff]
    %v100 = vld [vmem:[%s90 + $0x48] sm:$0xff]
    %v101 = vld [vmem:[%s90 + $0x50] sm:$0xff]
    %v102 = vld [vmem:[%s90 + $0x58] sm:$0xff]
    %v103 = vld [vmem:[%s90 + $0x60] sm:$0xff]
    %v104 = vld [vmem:[%s90 + $0x68] sm:$0xff]
    %v105 = vld [vmem:[%s90 + $0x70] sm:$0xff]
    %v106 = vld [vmem:[%s90 + $0x78] sm:$0xff]
    %s107 = scalar_lea.vmem %s2, 1
    %v108 = vld [vmem:[%s107] sm:$0x1]
    %v110 = vperm.slane %v108, 0
    %112 = vmatpush.msra.mxu0 %v106
    %113 = vmatpush.msra.mxu0 %v105
    %114 = vmatpush.msra.mxu0 %v104
    %115 = vmatpush.msra.mxu0 %v103
    %116 = vmatpush.msra.mxu0 %v102
    %117 = vmatpush.msra.mxu0 %v101
    %118 = vmatpush.msra.mxu0 %v100
    %119 = vmatpush.msra.mxu0 %v99
    %120 = vmatpush.msra.mxu0 %v98
    %121 = vmatpush.msra.mxu0 %v97
    %122 = vmatpush.msra.mxu0 %v96
    %123 = vmatpush.msra.mxu0 %v95
    %124 = vmatpush.msra.mxu0 %v94
    %125 = vmatpush.msra.mxu0 %v93
    %126 = vmatpush.msra.mxu0 %v92
    %127 = vmatpush.msra.mxu0 %v91
    %128 = vmatmul.f32.gmra.mxu0 %v89
    %v129 = vpop.f32.mrf.mxu0
    %v130 = vadd.f32 %v110, %v129
    %131 = vdwg.mxu0
    %v132 = vxor.u32 %v130, 2147483648
    %v133 = vmul.f32 %v132, 1.442695
    %v134 = vpow.pop %v133
    %v135 = vadd.f32 %v134, 1.0
    %v136 = vrcp.pop %v135
    %v137 = vmul.f32 %v135, %v136
    %v138 = vsub.f32 1.0, %v137
    %v139 = vmul.f32 %v136, %v138
    %v140 = vadd.f32 %v136, %v139
    %vm141 = vweird.f32 %v135
    %vm142 = vweird.f32 %v136
    %vm143 = vmor %vm141, %vm142
    %v144 = vsel %vm143, %v136, %v140
    %v145 = vand.u32 2147483647, %v135
    %vm146 = vcmp.eq.f32.partialorder %v145, 8.507059e+37
    %v147 = vand.u32 %v135, 2147483648
    %v148 = vor.u32 1.1754944e-38, %v147
    %v149 = vsel %vm146, %v148, %v144
    %v150 = vmul.f32 1.0, %v149
    %s151 = scalar_lea.vmem [#allocation2], 256
    %v152 = vld [vmem:[%s151] sm:$0xff]
    %v153 = vld [vmem:[%s151 + $0x8] sm:$0xff]
    %v154 = vld [vmem:[%s151 + $0x10] sm:$0xff]
    %v155 = vld [vmem:[%s151 + $0x18] sm:$0xff]
    %v156 = vld [vmem:[%s151 + $0x20] sm:$0xff]
    %v157 = vld [vmem:[%s151 + $0x28] sm:$0xff]
    %v158 = vld [vmem:[%s151 + $0x30] sm:$0xff]
    %v159 = vld [vmem:[%s151 + $0x38] sm:$0xff]
    %v160 = vld [vmem:[%s151 + $0x40] sm:$0xff]
    %v161 = vld [vmem:[%s151 + $0x48] sm:$0xff]
    %v162 = vld [vmem:[%s151 + $0x50] sm:$0xff]
    %v163 = vld [vmem:[%s151 + $0x58] sm:$0xff]
    %v164 = vld [vmem:[%s151 + $0x60] sm:$0xff]
    %v165 = vld [vmem:[%s151 + $0x68] sm:$0xff]
    %v166 = vld [vmem:[%s151 + $0x70] sm:$0xff]
    %v167 = vld [vmem:[%s151 + $0x78] sm:$0xff]
    %s168 = scalar_lea.vmem %s2, 2
    %v169 = vld [vmem:[%s168] sm:$0x1]
    %v171 = vperm.slane %v169, 0
    %173 = vmatpush.msra.mxu0 %v167
    %174 = vmatpush.msra.mxu0 %v166
    %175 = vmatpush.msra.mxu0 %v165
    %176 = vmatpush.msra.mxu0 %v164
    %177 = vmatpush.msra.mxu0 %v163
    %178 = vmatpush.msra.mxu0 %v162
    %179 = vmatpush.msra.mxu0 %v161
    %180 = vmatpush.msra.mxu0 %v160
    %181 = vmatpush.msra.mxu0 %v159
    %182 = vmatpush.msra.mxu0 %v158
    %183 = vmatpush.msra.mxu0 %v157
    %184 = vmatpush.msra.mxu0 %v156
    %185 = vmatpush.msra.mxu0 %v155
    %186 = vmatpush.msra.mxu0 %v154
    %187 = vmatpush.msra.mxu0 %v153
    %188 = vmatpush.msra.mxu0 %v152
    %189 = vmatmul.f32.gmra.mxu0 %v150
    %v190 = vpop.f32.mrf.mxu0
    %v191 = vadd.f32 %v171, %v190
    %192 = vdwg.mxu0
    %v193 = vxor.u32 %v191, 2147483648
    %v194 = vmul.f32 %v193, 1.442695
    %v195 = vpow.pop %v194
    %v196 = vadd.f32 %v195, 1.0
    %v197 = vrcp.pop %v196
    %v198 = vmul.f32 %v196, %v197
    %v199 = vsub.f32 1.0, %v198
    %v200 = vmul.f32 %v197, %v199
    %v201 = vadd.f32 %v197, %v200
    %vm202 = vweird.f32 %v196
    %vm203 = vweird.f32 %v197
    %vm204 = vmor %vm202, %vm203
    %v205 = vsel %vm204, %v197, %v201
    %v206 = vand.u32 2147483647, %v196
    %vm207 = vcmp.eq.f32.partialorder %v206, 8.507059e+37
    %v208 = vand.u32 %v196, 2147483648
    %v209 = vor.u32 1.1754944e-38, %v208
    %v210 = vsel %vm207, %v209, %v205
    %v211 = vmul.f32 1.0, %v210
    %s212 = scalar_lea.vmem [#allocation2], 384
    %v213 = vld [vmem:[%s212] sm:$0xff]
    %v214 = vld [vmem:[%s212 + $0x8] sm:$0xff]
    %v215 = vld [vmem:[%s212 + $0x10] sm:$0xff]
    %v216 = vld [vmem:[%s212 + $0x18] sm:$0xff]
    %v217 = vld [vmem:[%s212 + $0x20] sm:$0xff]
    %v218 = vld [vmem:[%s212 + $0x28] sm:$0xff]
    %v219 = vld [vmem:[%s212 + $0x30] sm:$0xff]
    %v220 = vld [vmem:[%s212 + $0x38] sm:$0xff]
    %v221 = vld [vmem:[%s212 + $0x40] sm:$0xff]
    %v222 = vld [vmem:[%s212 + $0x48] sm:$0xff]
    %v223 = vld [vmem:[%s212 + $0x50] sm:$0xff]
    %v224 = vld [vmem:[%s212 + $0x58] sm:$0xff]
    %v225 = vld [vmem:[%s212 + $0x60] sm:$0xff]
    %v226 = vld [vmem:[%s212 + $0x68] sm:$0xff]
    %v227 = vld [vmem:[%s212 + $0x70] sm:$0xff]
    %v228 = vld [vmem:[%s212 + $0x78] sm:$0xff]
    %s229 = scalar_lea.vmem %s2, 3
    %v230 = vld [vmem:[%s229] sm:$0x1]
    %v232 = vperm.slane %v230, 0
    %234 = vmatpush.msra.mxu0 %v228
    %235 = vmatpush.msra.mxu0 %v227
    %236 = vmatpush.msra.mxu0 %v226
    %237 = vmatpush.msra.mxu0 %v225
    %238 = vmatpush.msra.mxu0 %v224
    %239 = vmatpush.msra.mxu0 %v223
    %240 = vmatpush.msra.mxu0 %v222
    %241 = vmatpush.msra.mxu0 %v221
    %242 = vmatpush.msra.mxu0 %v220
    %243 = vmatpush.msra.mxu0 %v219
    %244 = vmatpush.msra.mxu0 %v218
    %245 = vmatpush.msra.mxu0 %v217
    %246 = vmatpush.msra.mxu0 %v216
    %247 = vmatpush.msra.mxu0 %v215
    %248 = vmatpush.msra.mxu0 %v214
    %249 = vmatpush.msra.mxu0 %v213
    %250 = vmatmul.f32.gmra.mxu0 %v211
    %v251 = vpop.f32.mrf.mxu0
    %v252 = vadd.f32 %v232, %v251
    %253 = vdwg.mxu0
    %v254 = vxor.u32 %v252, 2147483648
    %v255 = vmul.f32 %v254, 1.442695
    %v256 = vpow.pop %v255
    %v257 = vadd.f32 %v256, 1.0
    %v258 = vrcp.pop %v257
    %v259 = vmul.f32 %v257, %v258
    %v260 = vsub.f32 1.0, %v259
    %v261 = vmul.f32 %v258, %v260
    %v262 = vadd.f32 %v258, %v261
    %vm263 = vweird.f32 %v257
    %vm264 = vweird.f32 %v258
    %vm265 = vmor %vm263, %vm264
    %v266 = vsel %vm265, %v258, %v262
    %v267 = vand.u32 2147483647, %v257
    %vm268 = vcmp.eq.f32.partialorder %v267, 8.507059e+37
    %v269 = vand.u32 %v257, 2147483648
    %v270 = vor.u32 1.1754944e-38, %v269
    %v271 = vsel %vm268, %v270, %v266
    %v272 = vmul.f32 1.0, %v271
    %s273 = scalar_lea.vmem [#allocation2], 512
    %v274 = vld [vmem:[%s273] sm:$0xff]
    %v275 = vld [vmem:[%s273 + $0x8] sm:$0xff]
    %v276 = vld [vmem:[%s273 + $0x10] sm:$0xff]
    %v277 = vld [vmem:[%s273 + $0x18] sm:$0xff]
    %v278 = vld [vmem:[%s273 + $0x20] sm:$0xff]
    %v279 = vld [vmem:[%s273 + $0x28] sm:$0xff]
    %v280 = vld [vmem:[%s273 + $0x30] sm:$0xff]
    %v281 = vld [vmem:[%s273 + $0x38] sm:$0xff]
    %v282 = vld [vmem:[%s273 + $0x40] sm:$0xff]
    %v283 = vld [vmem:[%s273 + $0x48] sm:$0xff]
    %v284 = vld [vmem:[%s273 + $0x50] sm:$0xff]
    %v285 = vld [vmem:[%s273 + $0x58] sm:$0xff]
    %v286 = vld [vmem:[%s273 + $0x60] sm:$0xff]
    %v287 = vld [vmem:[%s273 + $0x68] sm:$0xff]
    %v288 = vld [vmem:[%s273 + $0x70] sm:$0xff]
    %v289 = vld [vmem:[%s273 + $0x78] sm:$0xff]
    %s290 = scalar_lea.vmem %s2, 4
    %v291 = vld [vmem:[%s290] sm:$0x1]
    %v293 = vperm.slane %v291, 0
    %295 = vmatpush.msra.mxu0 %v289
    %296 = vmatpush.msra.mxu0 %v288
    %297 = vmatpush.msra.mxu0 %v287
    %298 = vmatpush.msra.mxu0 %v286
    %299 = vmatpush.msra.mxu0 %v285
    %300 = vmatpush.msra.mxu0 %v284
    %301 = vmatpush.msra.mxu0 %v283
    %302 = vmatpush.msra.mxu0 %v282
    %303 = vmatpush.msra.mxu0 %v281
    %304 = vmatpush.msra.mxu0 %v280
    %305 = vmatpush.msra.mxu0 %v279
    %306 = vmatpush.msra.mxu0 %v278
    %307 = vmatpush.msra.mxu0 %v277
    %308 = vmatpush.msra.mxu0 %v276
    %309 = vmatpush.msra.mxu0 %v275
    %310 = vmatpush.msra.mxu0 %v274
    %311 = vmatmul.f32.gmra.mxu0 %v272
    %v312 = vpop.f32.mrf.mxu0
    %v313 = vadd.f32 %v293, %v312
    %314 = vdwg.mxu0
    %v315 = vxor.u32 %v313, 2147483648
    %v316 = vmul.f32 %v315, 1.442695
    %v317 = vpow.pop %v316
    %v318 = vadd.f32 %v317, 1.0
    %v319 = vrcp.pop %v318
    %v320 = vmul.f32 %v318, %v319
    %v321 = vsub.f32 1.0, %v320
    %v322 = vmul.f32 %v319, %v321
    %v323 = vadd.f32 %v319, %v322
    %vm324 = vweird.f32 %v318
    %vm325 = vweird.f32 %v319
    %vm326 = vmor %vm324, %vm325
    %v327 = vsel %vm326, %v319, %v323
    %v328 = vand.u32 2147483647, %v318
    %vm329 = vcmp.eq.f32.partialorder %v328, 8.507059e+37
    %v330 = vand.u32 %v318, 2147483648
    %v331 = vor.u32 1.1754944e-38, %v330
    %v332 = vsel %vm329, %v331, %v327
    %v333 = vmul.f32 1.0, %v332
    %s334 = scalar_lea.vmem [#allocation2], 640
    %v335 = vld [vmem:[%s334] sm:$0xff]
    %v336 = vld [vmem:[%s334 + $0x8] sm:$0xff]
    %v337 = vld [vmem:[%s334 + $0x10] sm:$0xff]
    %v338 = vld [vmem:[%s334 + $0x18] sm:$0xff]
    %v339 = vld [vmem:[%s334 + $0x20] sm:$0xff]
    %v340 = vld [vmem:[%s334 + $0x28] sm:$0xff]
    %v341 = vld [vmem:[%s334 + $0x30] sm:$0xff]
    %v342 = vld [vmem:[%s334 + $0x38] sm:$0xff]
    %v343 = vld [vmem:[%s334 + $0x40] sm:$0xff]
    %v344 = vld [vmem:[%s334 + $0x48] sm:$0xff]
    %v345 = vld [vmem:[%s334 + $0x50] sm:$0xff]
    %v346 = vld [vmem:[%s334 + $0x58] sm:$0xff]
    %v347 = vld [vmem:[%s334 + $0x60] sm:$0xff]
    %v348 = vld [vmem:[%s334 + $0x68] sm:$0xff]
    %v349 = vld [vmem:[%s334 + $0x70] sm:$0xff]
    %v350 = vld [vmem:[%s334 + $0x78] sm:$0xff]
    %s351 = scalar_lea.vmem %s2, 5
    %v352 = vld [vmem:[%s351] sm:$0x1]
    %v354 = vperm.slane %v352, 0
    %356 = vmatpush.msra.mxu0 %v350
    %357 = vmatpush.msra.mxu0 %v349
    %358 = vmatpush.msra.mxu0 %v348
    %359 = vmatpush.msra.mxu0 %v347
    %360 = vmatpush.msra.mxu0 %v346
    %361 = vmatpush.msra.mxu0 %v345
    %362 = vmatpush.msra.mxu0 %v344
    %363 = vmatpush.msra.mxu0 %v343
    %364 = vmatpush.msra.mxu0 %v342
    %365 = vmatpush.msra.mxu0 %v341
    %366 = vmatpush.msra.mxu0 %v340
    %367 = vmatpush.msra.mxu0 %v339
    %368 = vmatpush.msra.mxu0 %v338
    %369 = vmatpush.msra.mxu0 %v337
    %370 = vmatpush.msra.mxu0 %v336
    %371 = vmatpush.msra.mxu0 %v335
    %372 = vmatmul.f32.gmra.mxu0 %v333
    %v373 = vpop.f32.mrf.mxu0
    %v374 = vadd.f32 %v354, %v373
    %375 = vdwg.mxu0
    %v376 = vxor.u32 %v374, 2147483648
    %v377 = vmul.f32 %v376, 1.442695
    %v378 = vpow.pop %v377
    %v379 = vadd.f32 %v378, 1.0
    %v380 = vrcp.pop %v379
    %v381 = vmul.f32 %v379, %v380
    %v382 = vsub.f32 1.0, %v381
    %v383 = vmul.f32 %v380, %v382
    %v384 = vadd.f32 %v380, %v383
    %vm385 = vweird.f32 %v379
    %vm386 = vweird.f32 %v380
    %vm387 = vmor %vm385, %vm386
    %v388 = vsel %vm387, %v380, %v384
    %v389 = vand.u32 2147483647, %v379
    %vm390 = vcmp.eq.f32.partialorder %v389, 8.507059e+37
    %v391 = vand.u32 %v379, 2147483648
    %v392 = vor.u32 1.1754944e-38, %v391
    %v393 = vsel %vm390, %v392, %v388
    %v394 = vmul.f32 1.0, %v393
    %395 = vst [vmem:[%s3] sm:$0xff] %v394
    // Predicated region
    $region18: #{nn_parity_forward.1} parent=1 // pred_check
      _
    $region19: #{nn_parity_forward.1} parent=1 // pred_check_branch
      %397 = sbr.rel (0) target = $region21
    $region20: #{nn_parity_forward.1} parent=1 // pred_region
      _
    $region21: #{nn_parity_forward.1} parent=1 // pred_fallthru
      _
    // Predicated region
    $region22: #{nn_parity_forward.1} parent=1 // pred_check
      _
    $region23: #{nn_parity_forward.1} parent=1 // pred_check_branch
      %399 = sbr.rel (0) target = $region25
    $region24: #{nn_parity_forward.1} parent=1 // pred_region
      _
    $region25: #{nn_parity_forward.1} parent=1 // pred_fallthru
      _
    %400 = vsyncpa [#allocation3], 1

</llo_original>
